<compile_context>
chip_gen: v5e
topology: v5e:2x2
jax: 0.10.0
libtpu: 0.0.40
codegen_flags: <defaults>
</compile_context>

<pallas_src>
import jax
import jax.numpy as jnp
from jax.experimental import pallas as pl
from jax.experimental.pallas import tpu as pltpu

LANES = 128


def _l1_kernel(pred_ref, actual_ref, out_ref):
    # Elementwise absolute deviation on the VPU.
    out_ref[...] = jnp.abs(pred_ref[...] - actual_ref[...])


def _round_up(x, m):
    return ((x + m - 1) // m) * m


def my_l1_forward(pred, actual, ps=None, y=None, *,
                  block_rows=2048, pallas_min_elems=1024):
    """F.l1_loss(pred, actual, reduction='none').

    `ps` and `y` are accepted but ignored, matching the PyTorch module.
    """
    assert pred.shape == actual.shape
    # Match PyTorch's dtype promotion for mixed-precision inputs.
    out_dtype = jnp.promote_types(pred.dtype, actual.dtype)
    pred = pred.astype(out_dtype)
    actual = actual.astype(out_dtype)

    orig_shape = pred.shape
    n = pred.size

    # Tiny inputs: a single fused XLA elementwise op beats a Pallas launch.
    if n < pallas_min_elems:
        return jnp.abs(pred - actual)

    # Keep sublane counts aligned for packed dtypes (32 covers f32/bf16/i8/fp8).
    assert block_rows % 32 == 0, "block_rows must be a multiple of 32"

    pred_f = pred.reshape(-1)
    act_f = actual.reshape(-1)

    # Pad only to a multiple of the 128-lane width, and only when needed
    # (static Python check -> zero-cost fast path for the common case).
    if n % LANES != 0:
        n_pad = _round_up(n, LANES)
        pred_f = jnp.pad(pred_f, (0, n_pad - n))
        act_f = jnp.pad(act_f, (0, n_pad - n))
    else:
        n_pad = n

    rows = n_pad // LANES
    pred_2d = pred_f.reshape(rows, LANES)
    act_2d = act_f.reshape(rows, LANES)

    # Clamp the block height for small inputs (keep it (8,128)-aligned); the
    # ragged last block is handled by the cdiv grid (elementwise |a-b|
    # tolerates garbage in the masked region, and writes are bounded).
    br = min(block_rows, _round_up(rows, 8))
    grid = (pl.cdiv(rows, br),)
    spec = pl.BlockSpec((br, LANES), lambda i: (i, 0))

    out_2d = pl.pallas_call(
        _l1_kernel,
        out_shape=jax.ShapeDtypeStruct((rows, LANES), out_dtype),
        grid=grid,
        in_specs=[spec, spec],
        out_specs=spec,
        compiler_params=pltpu.CompilerParams(
            dimension_semantics=("parallel",),
        ),
    )(pred_2d, act_2d)

    out_flat = out_2d.reshape(-1)
    if n_pad != n:
        out_flat = out_flat[:n]
    return out_flat.reshape(orig_shape)


if __name__ == "__main__":
    key = jax.random.PRNGKey(0)
    k1, k2, k3, k4 = jax.random.split(key, 4)

    # Primary check: NCHW activations, lane-divisible size (no padding path).
    B, C, H, W = 2, 4, 16, 16
    pred = jax.random.normal(k1, (B, C, H, W), dtype=jnp.float32)
    actual = jax.random.normal(k2, (B, C, H, W), dtype=jnp.float32)
    ps = jnp.ones((B,), jnp.float32)   # ignored by forward (as in PyTorch)
    y = jnp.zeros((B,), jnp.float32)   # ignored by forward (as in PyTorch)

    loss = my_l1_forward(pred, actual, ps, y)
    jax.block_until_ready(loss)
    ref = jnp.abs(pred - actual)
    assert loss.shape == (B, C, H, W)
    assert jnp.allclose(loss, ref, atol=1e-6)

    # Secondary check: non-128-divisible size exercises the pad + ragged-block path.
    shp = (3, 5, 7, 13)  # 1365 elements
    p2 = jax.random.normal(k3, shp, dtype=jnp.float32)
    a2 = jax.random.normal(k4, shp, dtype=jnp.float32)
    l2 = my_l1_forward(p2, a2, ps, y)
    jax.block_until_ready(l2)
    assert l2.shape == shp
    assert jnp.allclose(l2, jnp.abs(p2 - a2), atol=1e-6)

    print("KERNEL_OK")
</pallas_src>

<mosaic_0001>
module attributes {stable_mosaic.version = 11 : i64} {
  func.func @_l1_kernel(%arg0: i32, %arg1: memref<16x128xf32, #tpu.memory_space<vmem>>, %arg2: memref<16x128xf32, #tpu.memory_space<vmem>>, %arg3: memref<16x128xf32, #tpu.memory_space<vmem>>) attributes {dimension_semantics = [#tpu.dimension_semantics<parallel>], iteration_bounds = array<i64: 1>, scalar_prefetch = 0 : i64, scratch_operands = 0 : i64, tpu.core_type = #tpu.core_type<tc>, window_params = [{transform_indices = @transform_0, window_bounds = array<i64: 16, 128>}, {transform_indices = @transform_1, window_bounds = array<i64: 16, 128>}, {transform_indices = @transform_2, window_bounds = array<i64: 16, 128>}]} {
    %c0 = arith.constant 0 : index
    %c0_0 = arith.constant 0 : index
    %0 = vector.load %arg1[%c0, %c0_0] : memref<16x128xf32, #tpu.memory_space<vmem>>, vector<16x128xf32>
    %c0_1 = arith.constant 0 : index
    %c0_2 = arith.constant 0 : index
    %1 = vector.load %arg2[%c0_1, %c0_2] : memref<16x128xf32, #tpu.memory_space<vmem>>, vector<16x128xf32>
    %2 = arith.subf %0, %1 : vector<16x128xf32>
    %3 = math.absf %2 : vector<16x128xf32>
    %c0_3 = arith.constant 0 : index
    %c0_4 = arith.constant 0 : index
    %4 = vector.load %arg3[%c0_3, %c0_4] : memref<16x128xf32, #tpu.memory_space<vmem>>, vector<16x128xf32>
    tpu.vector_store %arg3[%c0_3, %c0_4], %3 {strides = array<i32>} : memref<16x128xf32, #tpu.memory_space<vmem>>, vector<16x128xf32>,
    return
  }
  func.func @transform_0(%arg0: i32) -> (i32, i32) {
    %c0_i32 = arith.constant 0 : i32
    %c0_i32_0 = arith.constant 0 : i32
    return %arg0, %c0_i32 : i32, i32
  }
  func.func @transform_1(%arg0: i32) -> (i32, i32) {
    %c0_i32 = arith.constant 0 : i32
    %c0_i32_0 = arith.constant 0 : i32
    return %arg0, %c0_i32 : i32, i32
  }
  func.func @transform_2(%arg0: i32) -> (i32, i32) {
    %c0_i32 = arith.constant 0 : i32
    %c0_i32_0 = arith.constant 0 : i32
    return %arg0, %c0_i32 : i32, i32
  }
}

</mosaic_0001>

<llo_original>
// kernel: tpu_custom_call.1
$region0: #{tpu_custom_call.1}
  #allocation0 [shape = 'u32[]', space=smem, size = 0x4, offset = 0x4, fixed_abs, tag = 'smem constant byte address 0x4 - core index']
  #allocation1 [shape = 'u32[72,128]{1,0:T(1,128)}', space=vmem, size = 0x9000, scoped, tag = 'internal scratch']
  %s0 = inlined_call_operand.hbm [shape: f32[16,128], index: 0, kind: input, shape index: {}]
  %s1 = inlined_call_operand.hbm [shape: f32[16,128], index: 1, kind: input, shape index: {}]
  %s2 = inlined_call_operand.hbm [shape: f32[16,128], index: 2, kind: output, shape index: {}]
  %s3 = sld [smem:[#allocation0]]
  $region26: #{tpu_custom_call.1} parent=0
    _
  %s5 = ssub.s32 1, %s3
  %s6 = scalar_select 0, %s5, %s3
  $region1: #{tpu_custom_call.1} parent=0
    #allocation2 [shape = 'u8[8192]{0}', space=vmem, size = 0x2000, scoped, tag = 'input window, operand 0, single buffered']
    #allocation3 [shape = 's32[1]{0}', space=sflag, size = 0x4, scoped, tag = 'scoped memory for tpu_custom_call.1']
    #allocation4 [shape = 's32[1]{0}', space=sflag, size = 0x4, scoped, tag = 'scoped memory for tpu_custom_call.1']
    #allocation5 [shape = 'u8[8192]{0}', space=vmem, size = 0x2000, scoped, tag = 'input window, operand 1, single buffered']
    #allocation6 [shape = 's32[1]{0}', space=sflag, size = 0x4, scoped, tag = 'scoped memory for tpu_custom_call.1']
    #allocation7 [shape = 'u8[8192]{0}', space=vmem, size = 0x2000, scoped, tag = 'output window, operand 0, single buffered']
    %7 = vsyncpa [#allocation3], 0
    %8 = vsyncpa [#allocation6], 0
    %9 = vsyncpa [#allocation4], 0
    // Predicated region
    $region2: #{tpu_custom_call.1} parent=1 // pred_check
      _
    $region3: #{tpu_custom_call.1} parent=1 // pred_check_branch
      %11 = sbr.rel (0) target = $region5
    $region4: #{tpu_custom_call.1} parent=1 // pred_region
      %13 = vsyncadd [#allocation3], 0
      %s14 = sshll.u32 %s0, 4
      %s15 = int_to_ptr.hbm [resolvable:$true] %s14
      %s16 = sshll.u32 [#allocation2], 4
      %s17 = int_to_ptr.vmem [resolvable:$true] %s16
      %22 = dma.hbm_to_vmem [thread:$0]  %s15, 256, %s17, [#allocation3], 128, 128, 8
    $region5: #{tpu_custom_call.1} parent=1 // pred_fallthru
      _
    // Predicated region
    $region6: #{tpu_custom_call.1} parent=1 // pred_check
      _
    $region7: #{tpu_custom_call.1} parent=1 // pred_check_branch
      %24 = sbr.rel (0) target = $region9
    $region8: #{tpu_custom_call.1} parent=1 // pred_region
      %26 = vsyncadd [#allocation6], 0
      %s27 = sshll.u32 %s1, 4
      %s28 = int_to_ptr.hbm [resolvable:$true] %s27
      %s29 = sshll.u32 [#allocation5], 4
      %s30 = int_to_ptr.vmem [resolvable:$true] %s29
      %35 = dma.hbm_to_vmem [thread:$0]  %s28, 256, %s30, [#allocation6], 128, 128, 8
    $region9: #{tpu_custom_call.1} parent=1 // pred_fallthru
      _
    // Predicated region
    $region10: #{tpu_custom_call.1} parent=1 // pred_check
      _
    $region11: #{tpu_custom_call.1} parent=1 // pred_check_branch
      %37 = sbr.rel (0) target = $region13
    $region12: #{tpu_custom_call.1} parent=1 // pred_region
      %39 = dma.done [#allocation3], 256
    $region13: #{tpu_custom_call.1} parent=1 // pred_fallthru
      _
    // Predicated region
    $region14: #{tpu_custom_call.1} parent=1 // pred_check
      _
    $region15: #{tpu_custom_call.1} parent=1 // pred_check_branch
      %41 = sbr.rel (0) target = $region17
    $region16: #{tpu_custom_call.1} parent=1 // pred_region
      %43 = dma.done [#allocation6], 256
    $region17: #{tpu_custom_call.1} parent=1 // pred_fallthru
      _
    %v44 = vld [vmem:[#allocation2] sm:$0xff]
    %v45 = vld [vmem:[#allocation2 + $0x8] sm:$0xff]
    %v46 = vld [vmem:[#allocation5] sm:$0xff]
    %v47 = vld [vmem:[#allocation5 + $0x8] sm:$0xff]
    %v48 = vsub.f32 %v44, %v46
    %v49 = vsub.f32 %v45, %v47
    %v50 = vand.u32 2147483647, %v48
    %v51 = vand.u32 2147483647, %v49
    %52 = vst [vmem:[#allocation7] sm:$0xff] %v50
    %53 = vst [vmem:[#allocation7 + $0x8] sm:$0xff] %v51
    // Predicated region
    $region18: #{tpu_custom_call.1} parent=1 // pred_check
      _
    $region19: #{tpu_custom_call.1} parent=1 // pred_check_branch
      %55 = sbr.rel (0) target = $region21
    $region20: #{tpu_custom_call.1} parent=1 // pred_region
      %57 = vsyncadd [#allocation4], 0
      %s58 = sshll.u32 [#allocation7], 4
      %s59 = int_to_ptr.vmem [resolvable:$true] %s58
      %s60 = sshll.u32 %s2, 4
      %s61 = int_to_ptr.hbm [resolvable:$true] %s60
      %66 = dma.vmem_to_hbm [thread:$0]  %s59, 256, %s61, [#allocation4], 128, 128, 8
    $region21: #{tpu_custom_call.1} parent=1 // pred_fallthru
      _
    // Predicated region
    $region22: #{tpu_custom_call.1} parent=1 // pred_check
      _
    $region23: #{tpu_custom_call.1} parent=1 // pred_check_branch
      %68 = sbr.rel (0) target = $region25
    $region24: #{tpu_custom_call.1} parent=1 // pred_region
      %70 = dma.done [#allocation4], 256
    $region25: #{tpu_custom_call.1} parent=1 // pred_fallthru
      _
    %71 = vsyncpa [#allocation3], 1
    %72 = vsyncpa [#allocation6], 1
    %73 = vsyncpa [#allocation4], 1

</llo_original>
